<compile_context>
chip_gen: v6e
topology: v6e:2x2x1
jax: 0.10.0
libtpu: 0.0.40
codegen_flags: <defaults>
</compile_context>

<pallas_src>
import functools
import math

import jax
import jax.numpy as jnp
from jax import lax
from jax.experimental import pallas as pl
from jax.experimental.pallas import tpu as pltpu


# ----------------------------- helpers ------------------------------------- #

def _apply_activation(h, activation):
    if activation is None:
        return h
    if callable(activation):
        return activation(h)
    if activation == "relu":
        return jnp.maximum(h, 0.0)
    if activation == "tanh":
        return jnp.tanh(h)
    if activation == "sigmoid":
        return jax.nn.sigmoid(h)
    if activation == "gelu":            # exact erf: matches PyTorch nn.GELU default
        return jax.nn.gelu(h, approximate=False)
    if activation == "gelu_tanh":
        return jax.nn.gelu(h, approximate=True)
    raise ValueError(f"unsupported activation: {activation!r}")


def _sublane_align(dtype):
    """Sub-32-bit dtypes pack along sublanes: align tm to 8 (f32) / 16 (bf16) / 32 (int8/fp8)."""
    bits = jnp.dtype(dtype).itemsize * 8
    return max(8, 256 // bits)


def _pick_parallel_tile(dim, preferred, align):
    """Tile for a parallel (M/N) axis. Ragged tails are fine (masked edge blocks)."""
    if dim <= preferred:
        return dim                      # full-extent block is always layout-legal
    return max(align, (preferred // align) * align)


def _tile_candidates(first, align):
    """Descending candidate tile sizes: first, then halved down to `align`."""
    cands = [first]
    t = ((first // 2) // align) * align
    while t >= align:
        cands.append(t)
        if t == align:
            break
        t = ((t // 2) // align) * align
    return cands


def _tile_vmem_bytes(tm, tn, tk, collapsed, x_bytes, w_bytes, out_bytes, has_bias):
    """Double-buffered inputs + double-buffered output + f32 accumulator scratch."""
    inp = 2 * (tm * tk * x_bytes + tn * tk * w_bytes)
    if has_bias:
        inp += 2 * tn * 4
    out = 2 * tm * tn * out_bytes
    scratch = 0 if collapsed else tm * tn * 4
    return inp + out + scratch


def _chip_params():
    """Generation-aware (tile_budget, vmem_limit_cap, is_v5e)."""
    vmem_cap = None
    try:
        vmem_cap = int(pltpu.get_tpu_info().vmem_capacity_bytes)
    except Exception:
        vmem_cap = None
    kind = ""
    try:
        kind = jax.devices()[0].device_kind.lower()
    except Exception:
        pass
    is_v5e = ("v5 lite" in kind) or ("v5e" in kind) or ("v5litepod" in kind)
    if vmem_cap is None:
        vmem_cap = 64 * 1024 * 1024          # conservative fallback (safe on v7x)
    if vmem_cap <= 64 * 1024 * 1024:
        # v7x: 64 MiB per TC, grid sharded across 2 TCs -> keep per-core tiles small.
        budget = 24 * 1024 * 1024
        vmem_limit_cap = 52 * 1024 * 1024
    else:
        # v5e / v6e: 128 MiB physical VMEM.
        budget = 44 * 1024 * 1024
        vmem_limit_cap = 100 * 1024 * 1024
    return budget, vmem_limit_cap, is_v5e


def _select_tiles(M, N, K, align_m, budget, x_bytes, w_bytes, out_bytes, has_bias,
                  tm, tn, tk):
    """Pick (tm, tn, tk, collapsed). Prefers: collapsed K, then large tm, then large tn."""
    if tm is None:
        tm0 = _pick_parallel_tile(M, 512, align_m)
        tm_cands = _tile_candidates(tm0, align_m)
    else:
        tm0 = min(tm, M)
        tm_cands = [tm0]
    if tn is None:
        tn_cap = 2048 if M <= tm0 else 512   # single row-block -> widen the weight/output tile
        tn0 = _pick_parallel_tile(N, tn_cap, 128)
        tn_cands = _tile_candidates(tn0, 128)
    else:
        tn_cands = [min(tn, N)]

    user_tk = None if tk is None else min(tk, K)

    # 1) Collapsed reduction (whole K resident) -- preferred.
    if user_tk is None or user_tk >= K:
        for cm in tm_cands:                  # keep tm large first (less weight re-streaming)
            for cn in tn_cands:
                if _tile_vmem_bytes(cm, cn, K, True, x_bytes, w_bytes,
                                    out_bytes, has_bias) <= budget:
                    return cm, cn, K, True
        if user_tk is not None:              # user asked for collapsed; honor with smallest tiles
            return tm_cands[-1], tn_cands[-1], K, True

    # 2) K-tiled fallback with f32 accumulator.
    for cm in tm_cands:
        for cn in tn_cands:
            if user_tk is not None:
                if _tile_vmem_bytes(cm, cn, user_tk, False, x_bytes, w_bytes,
                                    out_bytes, has_bias) <= budget:
                    return cm, cn, user_tk, False
            else:
                fixed = 2 * cm * cn * out_bytes + cm * cn * 4 + (2 * cn * 4 if has_bias else 0)
                per_k = 2 * (cm * x_bytes + cn * w_bytes)
                ck = ((budget - fixed) // per_k) // 128 * 128
                ck = min(ck, ((K + 127) // 128) * 128)
                if ck >= 128:
                    return cm, cn, int(ck), False
    # Last resort.
    return tm_cands[-1], tn_cands[-1], (user_tk or 128), False


# ----------------------------- kernels ------------------------------------- #

def _fused_kernel(*refs, activation, has_bias):
    """Whole-K resident: one fused matmul + bias + activation per (i, j) tile."""
    if has_bias:
        x_ref, w_ref, b_ref, o_ref = refs
    else:
        x_ref, w_ref, o_ref = refs
        b_ref = None
    a = x_ref[...]
    w = w_ref[...]
    if a.dtype != w.dtype:
        a = a.astype(w.dtype)                # cast activations in-kernel (weight stays persistent dtype)
    h = lax.dot_general(
        a, w,
        dimension_numbers=(((1,), (1,)), ((), ())),   # contract K with K (MXU-native, no transpose copy)
        preferred_element_type=jnp.float32,
    )
    if b_ref is not None:
        h = h + b_ref[...]                   # (tm, tn) + (1, tn)
    o_ref[...] = _apply_activation(h, activation).astype(o_ref.dtype)


def _acc_kernel(*refs, activation, has_bias):
    """K-tiled fallback: accumulate over grid axis 2; bias folded into init."""
    if has_bias:
        x_ref, w_ref, b_ref, o_ref, acc_ref = refs
    else:
        x_ref, w_ref, o_ref, acc_ref = refs
        b_ref = None
    k = pl.program_id(2)

    @pl.when(k == 0)
    def _():
        if b_ref is not None:
            acc_ref[...] = jnp.broadcast_to(
                b_ref[...].astype(jnp.float32), acc_ref.shape)
        else:
            acc_ref[...] = jnp.zeros_like(acc_ref)

    a = x_ref[...]
    w = w_ref[...]
    if a.dtype != w.dtype:
        a = a.astype(w.dtype)
    acc_ref[...] += lax.dot_general(
        a, w,
        dimension_numbers=(((1,), (1,)), ((), ())),
        preferred_element_type=jnp.float32,
    )

    @pl.when(k == pl.num_programs(2) - 1)
    def _():
        o_ref[...] = _apply_activation(acc_ref[...], activation).astype(o_ref.dtype)


# ----------------------------- wrapper ------------------------------------- #

def nonlinear_forward(x, weight, bias=None, activation=None, *,
                      tm=None, tn=None, tk=None):
    """Pallas equivalent of NonLinear.forward: activation(x @ W.T + b).

    x:      (M, K)
    weight: (N, K)  -- PyTorch nn.Linear layout, consumed in its stored dtype
                       (store it once as bf16/fp8 outside the hot path for quantized runs).
    bias:   (N,) or None (None removes the bias input and add entirely).
    """
    M, K = x.shape
    N, K2 = weight.shape
    assert K == K2, "weight must be (output_size, input_size)"

    out_dtype = x.dtype
    has_bias = bias is not None

    x_bytes = jnp.dtype(x.dtype).itemsize
    w_bytes = jnp.dtype(weight.dtype).itemsize
    out_bytes = jnp.dtype(out_dtype).itemsize

    budget, vmem_limit_cap, is_v5e = _chip_params()
    align_m = max(_sublane_align(x.dtype), _sublane_align(out_dtype))

    tm_, tn_, tk_, collapsed = _select_tiles(
        M, N, K, align_m, budget, x_bytes, w_bytes, out_bytes, has_bias, tm, tn, tk)

    # --- K padding for the K-tiled path (zeros contribute nothing) ---
    x_in, w_in = x, weight
    K_eff = K
    if not collapsed:
        if tk_ % 128 != 0:
            raise ValueError("tk must be a multiple of 128 for the K-tiled path")
        K_pad = pl.cdiv(K, tk_) * tk_
        if K_pad != K:
            # TODO(synk): pre-pad persistent weights once at parameter setup to avoid this per-call pad.
            x_in = jnp.pad(x_in, ((0, 0), (0, K_pad - K)))
            w_in = jnp.pad(w_in, ((0, 0), (0, K_pad - K)))
        K_eff = K_pad

    b2d = bias.reshape(1, N).astype(jnp.float32) if has_bias else None

    def _w_spec(shape, idx_map):
        # v5e: lowest HBM BW -> deepen the weight pipeline to hide per-step DMA jitter.
        if is_v5e:
            try:
                return pl.BlockSpec(shape, idx_map, pipeline_mode=pl.Buffered(3))
            except Exception:
                pass
        return pl.BlockSpec(shape, idx_map)

    if collapsed:
        gm, gn = pl.cdiv(M, tm_), pl.cdiv(N, tn_)
        # Residency choice: keep the operand whose re-streaming would be costlier
        # constant over the inner grid axis.
        traffic_stream_w = M * K * x_bytes + gm * N * K * w_bytes   # x resident per i, W streams
        traffic_stream_x = N * K * w_bytes + gn * M * K * x_bytes   # W resident per j, x streams
        stream_weight = traffic_stream_w <= traffic_stream_x

        if stream_weight:
            grid = (gm, gn)
            x_spec = pl.BlockSpec((tm_, K), lambda i, j: (i, 0))
            w_spec = _w_spec((tn_, K), lambda i, j: (j, 0))
            b_spec = pl.BlockSpec((1, tn_), lambda i, j: (0, j))
            o_spec = pl.BlockSpec((tm_, tn_), lambda i, j: (i, j))
        else:
            grid = (gn, gm)
            x_spec = pl.BlockSpec((tm_, K), lambda j, i: (i, 0))
            w_spec = _w_spec((tn_, K), lambda j, i: (j, 0))
            b_spec = pl.BlockSpec((1, tn_), lambda j, i: (0, j))
            o_spec = pl.BlockSpec((tm_, tn_), lambda j, i: (i, j))

        in_specs = [x_spec, w_spec] + ([b_spec] if has_bias else [])
        kernel = functools.partial(_fused_kernel, activation=activation, has_bias=has_bias)
        grid_spec = pltpu.PrefetchScalarGridSpec(
            num_scalar_prefetch=0, grid=grid,
            in_specs=in_specs, out_specs=o_spec)
        dim_sem = ("parallel", "parallel")
        tile_bytes = _tile_vmem_bytes(tm_, tn_, K, True, x_bytes, w_bytes, out_bytes, has_bias)
    else:
        grid = (pl.cdiv(M, tm_), pl.cdiv(N, tn_), K_eff // tk_)
        x_spec = pl.BlockSpec((tm_, tk_), lambda i, j, k: (i, k))
        w_spec = _w_spec((tn_, tk_), lambda i, j, k: (j, k))
        b_spec = pl.BlockSpec((1, tn_), lambda i, j, k: (0, j))
        o_spec = pl.BlockSpec((tm_, tn_), lambda i, j, k: (i, j))

        in_specs = [x_spec, w_spec] + ([b_spec] if has_bias else [])
        kernel = functools.partial(_acc_kernel, activation=activation, has_bias=has_bias)
        grid_spec = pltpu.PrefetchScalarGridSpec(
            num_scalar_prefetch=0, grid=grid,
            in_specs=in_specs, out_specs=o_spec,
            scratch_shapes=[pltpu.VMEM((tm_, tn_), jnp.float32)])
        dim_sem = ("parallel", "parallel", "arbitrary")
        tile_bytes = _tile_vmem_bytes(tm_, tn_, tk_, False, x_bytes, w_bytes, out_bytes, has_bias)

    # tile_bytes already includes double-buffering; just add modest compiler headroom.
    vmem_limit = int(min(max(tile_bytes + (8 << 20), 32 << 20), vmem_limit_cap))

    operands = [x_in, w_in] + ([b2d] if has_bias else [])
    return pl.pallas_call(
        kernel,
        out_shape=jax.ShapeDtypeStruct((M, N), out_dtype),
        grid_spec=grid_spec,
        compiler_params=pltpu.CompilerParams(
            dimension_semantics=dim_sem,
            vmem_limit_bytes=vmem_limit,
        ),
    )(*operands)


def init_linear_params(key, input_size, output_size):
    """Deterministic init matching nn.Linear's kaiming-uniform scheme (synthetic)."""
    kw, kb = jax.random.split(key)
    bound_w = math.sqrt(1.0 / input_size) * math.sqrt(3.0)
    weight = jax.random.uniform(
        kw, (output_size, input_size), jnp.float32, -bound_w, bound_w)
    bound_b = 1.0 / math.sqrt(input_size)
    bias = jax.random.uniform(kb, (output_size,), jnp.float32, -bound_b, bound_b)
    return weight, bias


if __name__ == "__main__":
    key = jax.random.PRNGKey(0)
    k_x, k_p = jax.random.split(key)

    batch = 8
    input_size = 256
    output_size = 128

    x = jax.random.normal(k_x, (batch, input_size), dtype=jnp.float32)
    weight, bias = init_linear_params(k_p, input_size, output_size)
    ref = x @ weight.T + bias

    # 1) default path: whole-K fused kernel, activation=None (identity)
    out = nonlinear_forward(x, weight, bias, activation=None)
    jax.block_until_ready(out)
    assert out.shape == (batch, output_size)
    assert jnp.max(jnp.abs(out - ref)) < 1e-4

    # 2) relu activation branch
    out_relu = nonlinear_forward(x, weight, bias, activation="relu")
    jax.block_until_ready(out_relu)
    assert jnp.max(jnp.abs(out_relu - jnp.maximum(ref, 0.0))) < 1e-4

    # 3) force the K-tiled accumulator fallback path (tk < K)
    out_acc = nonlinear_forward(x, weight, bias, activation=None, tk=128)
    jax.block_until_ready(out_acc)
    assert jnp.max(jnp.abs(out_acc - ref)) < 1e-4

    # 4) persistent bf16 weight (cast ONCE outside the hot path); x cast per-tile in-kernel
    weight_bf16 = weight.astype(jnp.bfloat16)
    out_bf16 = nonlinear_forward(x, weight_bf16, bias, activation=None)
    jax.block_until_ready(out_bf16)
    assert jnp.max(jnp.abs(out_bf16 - ref)) < 5e-2

    # 5) bias=None: bias input, DMA, and add are dropped entirely
    out_nb = nonlinear_forward(x, weight, None, activation=None)
    jax.block_until_ready(out_nb)
    assert jnp.max(jnp.abs(out_nb - x @ weight.T)) < 1e-4

    print("KERNEL_OK")
</pallas_src>

<mosaic_0001>
module attributes {stable_mosaic.version = 11 : i64} {
  func.func @_fused_kernel(%arg0: i32, %arg1: i32, %arg2: memref<8x256xf32, #tpu.memory_space<vmem>>, %arg3: memref<128x256xf32, #tpu.memory_space<vmem>>, %arg4: memref<1x128xf32, #tpu.memory_space<vmem>>, %arg5: memref<8x128xf32, #tpu.memory_space<vmem>>) attributes {dimension_semantics = [#tpu.dimension_semantics<parallel>, #tpu.dimension_semantics<parallel>], iteration_bounds = array<i64: 1, 1>, scalar_prefetch = 0 : i64, scratch_operands = 0 : i64, tpu.core_type = #tpu.core_type<tc>, window_params = [{transform_indices = @transform_0, window_bounds = array<i64: 8, 256>}, {transform_indices = @transform_1, window_bounds = array<i64: 128, 256>}, {transform_indices = @transform_2, window_bounds = array<i64: 1, 128>}, {transform_indices = @transform_3, window_bounds = array<i64: 8, 128>}]} {
    %c0 = arith.constant 0 : index
    %c0_0 = arith.constant 0 : index
    %0 = vector.load %arg2[%c0, %c0_0] : memref<8x256xf32, #tpu.memory_space<vmem>>, vector<8x256xf32>
    %c0_1 = arith.constant 0 : index
    %c0_2 = arith.constant 0 : index
    %1 = vector.load %arg3[%c0_1, %c0_2] : memref<128x256xf32, #tpu.memory_space<vmem>>, vector<128x256xf32>
    %cst = arith.constant dense<0.000000e+00> : vector<8x128xf32>
    %2 = tpu.matmul %0, %1, %cst {dimension_numbers = #tpu.dot_dimension_numbers<[1], [1], [0], [0], [0, 0, 1, 0], [], []>} : vector<8x256xf32>, vector<128x256xf32>, vector<8x128xf32> -> vector<8x128xf32>
    %c0_3 = arith.constant 0 : index
    %c0_4 = arith.constant 0 : index
    %3 = vector.load %arg4[%c0_3, %c0_4] : memref<1x128xf32, #tpu.memory_space<vmem>>, vector<1x128xf32>
    %4 = vector.broadcast %3 : vector<1x128xf32> to vector<8x128xf32>
    %5 = arith.addf %2, %4 : vector<8x128xf32>
    %c0_5 = arith.constant 0 : index
    %c0_6 = arith.constant 0 : index
    %6 = vector.load %arg5[%c0_5, %c0_6] : memref<8x128xf32, #tpu.memory_space<vmem>>, vector<8x128xf32>
    tpu.vector_store %arg5[%c0_5, %c0_6], %5 {strides = array<i32>} : memref<8x128xf32, #tpu.memory_space<vmem>>, vector<8x128xf32>,
    return
  }
  func.func @transform_0(%arg0: i32, %arg1: i32) -> (i32, i32) {
    %c0_i32 = arith.constant 0 : i32
    %c0_i32_0 = arith.constant 0 : i32
    return %arg0, %c0_i32 : i32, i32
  }
  func.func @transform_1(%arg0: i32, %arg1: i32) -> (i32, i32) {
    %c0_i32 = arith.constant 0 : i32
    %c0_i32_0 = arith.constant 0 : i32
    return %arg1, %c0_i32 : i32, i32
  }
  func.func @transform_2(%arg0: i32, %arg1: i32) -> (i32, i32) {
    %c0_i32 = arith.constant 0 : i32
    %c0_i32_0 = arith.constant 0 : i32
    return %c0_i32, %arg1 : i32, i32
  }
  func.func @transform_3(%arg0: i32, %arg1: i32) -> (i32, i32) {
    %c0_i32 = arith.constant 0 : i32
    return %arg0, %arg1 : i32, i32
  }
}

</mosaic_0001>

<llo_original>
// kernel: tpu_custom_call.1
$region0: #{tpu_custom_call.1}
  #allocation0 [shape = 'u32[]', space=smem, size = 0x4, offset = 0x4, fixed_abs, tag = 'smem constant byte address 0x4 - core index']
  #allocation1 [shape = 'u32[144,128]{1,0:T(1,128)}', space=vmem, size = 0x12000, scoped, tag = 'internal scratch']
  %s0 = inlined_call_operand.hbm [shape: f32[8,256], index: 0, kind: input, shape index: {}]
  %s1 = inlined_call_operand.hbm [shape: f32[128,256], index: 1, kind: input, shape index: {}]
  %s2 = inlined_call_operand.vmem [shape: f32[1,128], index: 2, kind: input, shape index: {}]
  %s3 = inlined_call_operand.hbm [shape: f32[8,128], index: 3, kind: output, shape index: {}]
  %s4 = sld [smem:[#allocation0]]
  $region30: #{tpu_custom_call.1} parent=0
    _
  %s6 = ssub.s32 1, %s4
  %s7 = scalar_select 0, %s6, %s4
  $region1: #{tpu_custom_call.1} parent=0
    #allocation2 [shape = 'u8[8192]{0}', space=vmem, size = 0x2000, scoped, tag = 'input window, operand 0, single buffered']
    #allocation3 [shape = 's32[1]{0}', space=sflag, size = 0x4, scoped, tag = 'scoped memory for tpu_custom_call.1']
    #allocation4 [shape = 's32[1]{0}', space=sflag, size = 0x4, scoped, tag = 'scoped memory for tpu_custom_call.1']
    #allocation5 [shape = 'u8[131072]{0}', space=vmem, size = 0x20000, scoped, tag = 'input window, operand 1, single buffered']
    #allocation6 [shape = 's32[1]{0}', space=sflag, size = 0x4, scoped, tag = 'scoped memory for tpu_custom_call.1']
    #allocation7 [shape = 'u8[4096]{0}', space=vmem, size = 0x1000, scoped, tag = 'output window, operand 0, single buffered']
    %8 = vsyncpa [#allocation3], 0
    %9 = vsyncpa [#allocation6], 0
    %10 = vsyncpa [#allocation4], 0
    // Predicated region
    $region2: #{tpu_custom_call.1} parent=1 // pred_check
      _
    $region3: #{tpu_custom_call.1} parent=1 // pred_check_branch
      %12 = sbr.rel (0) target = $region5
    $region4: #{tpu_custom_call.1} parent=1 // pred_region
      %s14 = ssub.s32 256, 256
      %15 = vsyncadd [#allocation3], %s14
      %s17 = sshll.u32 [#allocation2], 4
      %s18 = int_to_ptr.vmem [resolvable:$true] %s17
      %20 = dma.hbm_to_vmem [thread:$0]  %s0, 256, %s18, [#allocation3]
    $region5: #{tpu_custom_call.1} parent=1 // pred_fallthru
      _
    // Predicated region
    $region6: #{tpu_custom_call.1} parent=1 // pred_check
      _
    $region7: #{tpu_custom_call.1} parent=1 // pred_check_branch
      %22 = sbr.rel (0) target = $region9
    $region8: #{tpu_custom_call.1} parent=1 // pred_region
      %s24 = ssub.s32 4096, 4096
      %25 = vsyncadd [#allocation6], %s24
      %s26 = sshll.u32 [#allocation5], 4
      %s27 = int_to_ptr.vmem [resolvable:$true] %s26
      %32 = dma.hbm_to_vmem [thread:$0]  %s1, 4096, %s27, [#allocation6], 256, 256, 16
    $region9: #{tpu_custom_call.1} parent=1 // pred_fallthru
      _
    // Predicated region
    $region10: #{tpu_custom_call.1} parent=1 // pred_check
      _
    $region11: #{tpu_custom_call.1} parent=1 // pred_check_branch
      %34 = sbr.rel (0) target = $region13
    $region12: #{tpu_custom_call.1} parent=1 // pred_region
      _
    $region13: #{tpu_custom_call.1} parent=1 // pred_fallthru
      _
    // Predicated region
    $region14: #{tpu_custom_call.1} parent=1 // pred_check
      _
    $region15: #{tpu_custom_call.1} parent=1 // pred_check_branch
      %36 = sbr.rel (0) target = $region17
    $region16: #{tpu_custom_call.1} parent=1 // pred_region
      %37 = dma.done [#allocation3], 256
    $region17: #{tpu_custom_call.1} parent=1 // pred_fallthru
      _
    // Predicated region
    $region18: #{tpu_custom_call.1} parent=1 // pred_check
      _
    $region19: #{tpu_custom_call.1} parent=1 // pred_check_branch
      %39 = sbr.rel (0) target = $region21
    $region20: #{tpu_custom_call.1} parent=1 // pred_region
      %40 = dma.done [#allocation6], 4096
    $region21: #{tpu_custom_call.1} parent=1 // pred_fallthru
      _
    %v41 = vld [vmem:[#allocation2] sm:$0xff]
    %v42 = vld [vmem:[#allocation2 + $0x8] sm:$0xff]
    %v43 = vld [vmem:[#allocation5] sm:$0xff]
    %v44 = vld [vmem:[#allocation5 + $0x8] sm:$0xff]
    %v45 = vld [vmem:[#allocation5 + $0x10] sm:$0xff]
    %v46 = vld [vmem:[#allocation5 + $0x18] sm:$0xff]
    %v47 = vld [vmem:[#allocation5 + $0x20] sm:$0xff]
    %v48 = vld [vmem:[#allocation5 + $0x28] sm:$0xff]
    %v49 = vld [vmem:[#allocation5 + $0x30] sm:$0xff]
    %v50 = vld [vmem:[#allocation5 + $0x38] sm:$0xff]
    %v51 = vld [vmem:[#allocation5 + $0x40] sm:$0xff]
    %v52 = vld [vmem:[#allocation5 + $0x48] sm:$0xff]
    %v53 = vld [vmem:[#allocation5 + $0x50] sm:$0xff]
    %v54 = vld [vmem:[#allocation5 + $0x58] sm:$0xff]
    %v55 = vld [vmem:[#allocation5 + $0x60] sm:$0xff]
    %v56 = vld [vmem:[#allocation5 + $0x68] sm:$0xff]
    %v57 = vld [vmem:[#allocation5 + $0x70] sm:$0xff]
    %v58 = vld [vmem:[#allocation5 + $0x78] sm:$0xff]
    %v59 = vld [vmem:[#allocation5 + $0x80] sm:$0xff]
    %v60 = vld [vmem:[#allocation5 + $0x88] sm:$0xff]
    %v61 = vld [vmem:[#allocation5 + $0x90] sm:$0xff]
    %v62 = vld [vmem:[#allocation5 + $0x98] sm:$0xff]
    %v63 = vld [vmem:[#allocation5 + $0xa0] sm:$0xff]
    %v64 = vld [vmem:[#allocation5 + $0xa8] sm:$0xff]
    %v65 = vld [vmem:[#allocation5 + $0xb0] sm:$0xff]
    %v66 = vld [vmem:[#allocation5 + $0xb8] sm:$0xff]
    %v67 = vld [vmem:[#allocation5 + $0xc0] sm:$0xff]
    %v68 = vld [vmem:[#allocation5 + $0xc8] sm:$0xff]
    %v69 = vld [vmem:[#allocation5 + $0xd0] sm:$0xff]
    %v70 = vld [vmem:[#allocation5 + $0xd8] sm:$0xff]
    %v71 = vld [vmem:[#allocation5 + $0xe0] sm:$0xff]
    %v72 = vld [vmem:[#allocation5 + $0xe8] sm:$0xff]
    %v73 = vld [vmem:[#allocation5 + $0xf0] sm:$0xff]
    %v74 = vld [vmem:[#allocation5 + $0xf8] sm:$0xff]
    %v75 = vld [vmem:[%s2] sm:$0x1]
    %v77 = vlaneseq
    %v78 = vshrl.u32 %v77, 7
    %v79 = vsub.s32 0, %v78
    %v80 = vrot.slane %v75, %v79
    %82 = vmatprep.subr.mxu0 %v74
    %83 = vmatpush1.xpose.msra.mxu0 %v73
    %84 = vmatprep.subr.mxu0 %v72
    %85 = vmatpush1.xpose.msra.mxu0 %v71
    %86 = vmatprep.subr.mxu0 %v70
    %87 = vmatpush1.xpose.msra.mxu0 %v69
    %88 = vmatprep.subr.mxu0 %v68
    %89 = vmatpush1.xpose.msra.mxu0 %v67
    %90 = vmatprep.subr.mxu0 %v66
    %91 = vmatpush1.xpose.msra.mxu0 %v65
    %92 = vmatprep.subr.mxu0 %v64
    %93 = vmatpush1.xpose.msra.mxu0 %v63
    %94 = vmatprep.subr.mxu0 %v62
    %95 = vmatpush1.xpose.msra.mxu0 %v61
    %96 = vmatprep.subr.mxu0 %v60
    %97 = vmatpush1.xpose.msra.mxu0 %v59
    %98 = vmatprep.subr.mxu0 %v58
    %99 = vmatpush1.xpose.msra.mxu0 %v57
    %100 = vmatprep.subr.mxu0 %v56
    %101 = vmatpush1.xpose.msra.mxu0 %v55
    %102 = vmatprep.subr.mxu0 %v54
    %103 = vmatpush1.xpose.msra.mxu0 %v53
    %104 = vmatprep.subr.mxu0 %v52
    %105 = vmatpush1.xpose.msra.mxu0 %v51
    %106 = vmatprep.subr.mxu0 %v50
    %107 = vmatpush1.xpose.msra.mxu0 %v49
    %108 = vmatprep.subr.mxu0 %v48
    %109 = vmatpush1.xpose.msra.mxu0 %v47
    %110 = vmatprep.subr.mxu0 %v46
    %111 = vmatpush1.xpose.msra.mxu0 %v45
    %112 = vmatprep.subr.mxu0 %v44
    %113 = vmatpush1.xpose.msra.mxu0 %v43
    %114 = vmatprep.subr.mxu0 0.0
    %115 = vmatpush2.xpose.msra.mxu0 0.0
    %116 = vmatprep.subr.mxu0 0.0
    %117 = vmatpush2.xpose.msra.mxu0 0.0
    %118 = vmatprep.subr.mxu0 0.0
    %119 = vmatpush2.xpose.msra.mxu0 0.0
    %120 = vmatprep.subr.mxu0 0.0
    %121 = vmatpush2.xpose.msra.mxu0 0.0
    %122 = vmatprep.subr.mxu0 0.0
    %123 = vmatpush2.xpose.msra.mxu0 0.0
    %124 = vmatprep.subr.mxu0 0.0
    %125 = vmatpush2.xpose.msra.mxu0 0.0
    %126 = vmatprep.subr.mxu0 0.0
    %127 = vmatpush2.xpose.msra.mxu0 0.0
    %128 = vmatprep.subr.mxu0 0.0
    %129 = vmatpush2.xpose.msra.mxu0 0.0
    %130 = vmatprep.subr.mxu0 0.0
    %131 = vmatpush2.xpose.msra.mxu0 0.0
    %132 = vmatprep.subr.mxu0 0.0
    %133 = vmatpush2.xpose.msra.mxu0 0.0
    %134 = vmatprep.subr.mxu0 0.0
    %135 = vmatpush2.xpose.msra.mxu0 0.0
    %136 = vmatprep.subr.mxu0 0.0
    %137 = vmatpush2.xpose.msra.mxu0 0.0
    %138 = vmatprep.subr.mxu0 0.0
    %139 = vmatpush2.xpose.msra.mxu0 0.0
    %140 = vmatprep.subr.mxu0 0.0
    %141 = vmatpush2.xpose.msra.mxu0 0.0
    %142 = vmatprep.subr.mxu0 0.0
    %143 = vmatpush2.xpose.msra.mxu0 0.0
    %144 = vmatprep.subr.mxu0 0.0
    %145 = vmatpush2.xpose.msra.mxu0 0.0
    %146 = vmatprep.mubr.f32.mxu0 %v42
    %147 = vmatmul.mubr.f32.gmra.mxu0 %v41
    %v148 = vpop.f32.mrf.mxu0
    %v149 = vadd.f32 %v80, %v148
    %v150 = vpop.f32.mrf.mxu0
    %151 = vdwg.mxu0
    %152 = vst [vmem:[#allocation7] sm:$0xff] %v149
    // Predicated region
    $region22: #{tpu_custom_call.1} parent=1 // pred_check
      _
    $region23: #{tpu_custom_call.1} parent=1 // pred_check_branch
      %154 = sbr.rel (0) target = $region25
    $region24: #{tpu_custom_call.1} parent=1 // pred_region
      %s156 = ssub.s32 128, 128
      %157 = vsyncadd [#allocation4], %s156
      %s159 = sshll.u32 [#allocation7], 4
      %s160 = int_to_ptr.vmem [resolvable:$true] %s159
      %162 = dma.vmem_to_hbm [thread:$0]  %s160, 128, %s3, [#allocation4]
    $region25: #{tpu_custom_call.1} parent=1 // pred_fallthru
      _
    // Predicated region
    $region26: #{tpu_custom_call.1} parent=1 // pred_check
      _
    $region27: #{tpu_custom_call.1} parent=1 // pred_check_branch
      %164 = sbr.rel (0) target = $region29
    $region28: #{tpu_custom_call.1} parent=1 // pred_region
      %165 = dma.done [#allocation4], 128
    $region29: #{tpu_custom_call.1} parent=1 // pred_fallthru
      _
    %166 = vsyncpa [#allocation3], 1
    %167 = vsyncpa [#allocation6], 1
    %168 = vsyncpa [#allocation4], 1

</llo_original>
